<compile_context>
chip_gen: v6e
topology: v6e:2x2x1
jax: 0.10.0
libtpu: 0.0.40
codegen_flags: <defaults>
</compile_context>

<pallas_src>
import functools

import jax
import jax.numpy as jnp
from jax.experimental import pallas as pl
from jax.experimental.pallas import tpu as pltpu


# ----------------------------- helpers ---------------------------------------

def _vmem_bytes():
    """Physical VMEM per TensorCore; fall back to v7x's 64 MiB (the smallest)."""
    try:
        info = pltpu.get_tpu_info()
        return int(getattr(info, "vmem_capacity_bytes", 64 << 20))
    except Exception:
        return 64 << 20


def _vmem_time_tile(tB, width, itemsize, buffers=2):
    """Largest time tile s.t. the multi-buffered streamed input uses <= ~1/3 VMEM."""
    budget = _vmem_bytes() // 3
    tT = budget // max(1, buffers * tB * width * itemsize)
    return int(max(8, min(1024, (tT // 8) * 8)))


def _pick_time_tile(T, max_tile):
    """Largest sublane-aligned (multiple of 8) divisor of T <= max_tile.

    If none exists, return the aligned max_tile and let the wrapper zero-pad T
    (zeros do not perturb the time-sum; the mean divides by the true T)."""
    max_tile = max(8, (min(max_tile, max(T, 8)) // 8) * 8)
    for cand in range(min(max_tile, T), 7, -1):
        if T % cand == 0 and cand % 8 == 0:
            return cand
    return max_tile


def _pick_batch_tile(B):
    """v7x megacore: give the 'parallel' batch axis extent > 1 when B allows it."""
    if B >= 16:
        for cand in range(B // 2, 7, -1):
            if B % cand == 0 and cand % 8 == 0:
                return cand
    # Tiny B: single batch block (second TC idle on v7x; no-op on v5e/v6e).
    return B


def _pad_time(x, tT):
    """Zero-pad the time axis up to a multiple of tT (only in the awkward-T case)."""
    T = x.shape[1]
    T_pad = pl.cdiv(T, tT) * tT
    if T_pad != T:
        x = jnp.pad(x, ((0, 0), (0, T_pad - T), (0, 0)))
    return x, T_pad


def _stream_spec(block_shape, index_map, buffers):
    if buffers == 2:  # default pipeline depth -> plain BlockSpec
        return pl.BlockSpec(block_shape, index_map)
    return pl.BlockSpec(block_shape, index_map, pipeline_mode=pl.Buffered(buffers))


def _vmem_limit(stream_bytes, const_bytes, out_bytes, scratch_bytes):
    est = stream_bytes + 2 * const_bytes + 2 * out_bytes + scratch_bytes + (8 << 20)
    return int(min(_vmem_bytes(), max(est, 16 << 20)))


def _l2_normalize_rows(y):
    # F.normalize(y, dim=1): y / max(||y||_2, 1e-12) == y * rsqrt(max(sumsq, 1e-24))
    sumsq = jnp.sum(y * y, axis=1, keepdims=True)
    return y * jax.lax.rsqrt(jnp.maximum(sumsq, 1e-24))


def _relu_linear_normalize(x_mean_f32, wt_ref, b_ref, o_ref):
    """ReLU -> Linear (bf16 MXU, f32 acc) -> L2-normalize; W already [D, E]."""
    h = jnp.maximum(x_mean_f32, 0.0).astype(jnp.bfloat16)
    y = jax.lax.dot_general(
        h, wt_ref[...],
        dimension_numbers=(((1,), (0,)), ((), ())),
        preferred_element_type=jnp.float32)            # [tB, E]
    y = y + b_ref[...]                                  # bias broadcast [1, E]
    o_ref[...] = _l2_normalize_rows(y)


# ----------------------------- kernels ----------------------------------------

def _triplet_head_kernel(x_ref, wt_ref, b_ref, o_ref, acc_ref, *, inv_t):
    t = pl.program_id(1)

    @pl.when(t == 0)
    def _():
        acc_ref[...] = jnp.zeros_like(acc_ref)

    # Running time-sum (f32) of this [tB, tT, D] feature tile (XLU reduce).
    acc_ref[...] += jnp.sum(x_ref[...].astype(jnp.float32), axis=1)

    @pl.when(t == pl.num_programs(1) - 1)
    def _():
        x_mean = acc_ref[...] * inv_t                   # fold 1/T into one mul
        _relu_linear_normalize(x_mean, wt_ref, b_ref, o_ref)


def _triplet_fused_kernel(frames_ref, proj_ref, wt_ref, b_ref, o_ref, acc_ref, *, inv_t):
    t = pl.program_id(1)

    @pl.when(t == 0)
    def _():
        acc_ref[...] = jnp.zeros_like(acc_ref)

    # Stand-in projection is linear -> defer it: time-sum the RAW frames
    # (pure VPU adds, no per-tile matmul, no [B,T,D] tensor ever in HBM).
    acc_ref[...] += jnp.sum(frames_ref[...].astype(jnp.float32), axis=1)

    @pl.when(t == pl.num_programs(1) - 1)
    def _():
        f_mean = (acc_ref[...] * inv_t).astype(jnp.bfloat16)   # [tB, F]
        # Single projection matmul for the whole reduction (bf16 MXU, f32 acc).
        x_mean = jax.lax.dot_general(
            f_mean, proj_ref[...],
            dimension_numbers=(((1,), (0,)), ((), ())),
            preferred_element_type=jnp.float32)                # [tB, D]
        _relu_linear_normalize(x_mean, wt_ref, b_ref, o_ref)


# ----------------------------- wrappers ----------------------------------------

def triplet_head(x, w, b, *, max_time_tile=None, stream_buffers=2):
    """TripletModel head on precomputed SSL features.

    x: [B, T, D] features — streamed in whatever dtype the producer emitted
       (no wrapper-side cast => no extra HBM round trip); accumulation is f32.
    w: [E, D] (PyTorch Linear layout), b: [E].
    """
    B, T, D = x.shape
    E = w.shape[0]
    itemsize = jnp.dtype(x.dtype).itemsize

    tB = _pick_batch_tile(B)
    if max_time_tile is None:
        max_time_tile = _vmem_time_tile(tB, D, itemsize, stream_buffers)
    tT = _pick_time_tile(T, max_time_tile)
    x, T_pad = _pad_time(x, tT)
    grid = (B // tB, T_pad // tT)

    wt = jnp.transpose(w).astype(jnp.bfloat16)       # [D, E]: contraction (1,0)
    b2 = b.reshape(1, E).astype(jnp.float32)

    stream_bytes = stream_buffers * tB * tT * D * itemsize
    const_bytes = wt.size * 2 + b2.size * 4
    vmem_limit = _vmem_limit(stream_bytes, const_bytes, tB * E * 4, tB * D * 4)

    kernel = functools.partial(_triplet_head_kernel, inv_t=1.0 / T)
    return pl.pallas_call(
        kernel,
        out_shape=jax.ShapeDtypeStruct((B, E), jnp.float32),
        grid_spec=pltpu.PrefetchScalarGridSpec(
            num_scalar_prefetch=0,
            grid=grid,
            in_specs=[
                _stream_spec((tB, tT, D), lambda bi, ti: (bi, ti, 0), stream_buffers),
                pl.BlockSpec((D, E), lambda bi, ti: (0, 0)),
                pl.BlockSpec((1, E), lambda bi, ti: (0, 0)),
            ],
            out_specs=pl.BlockSpec((tB, E), lambda bi, ti: (bi, 0)),
            scratch_shapes=[pltpu.VMEM((tB, D), jnp.float32)],
        ),
        compiler_params=pltpu.CompilerParams(
            dimension_semantics=("parallel", "arbitrary"),
            vmem_limit_bytes=vmem_limit),
    )(x, wt, b2)


def triplet_fused(frames, proj, w, b, *, max_time_tile=None, stream_buffers=2):
    """Fused stand-in SSL frame projection + TripletModel head.

    frames: [B, T, F] framed waveform (streamed as-is, no wrapper cast),
    proj: [F, D] stand-in SSL projection, w: [E, D], b: [E].
    """
    B, T, Fr = frames.shape
    D = proj.shape[1]
    E = w.shape[0]
    itemsize = jnp.dtype(frames.dtype).itemsize

    tB = _pick_batch_tile(B)
    if max_time_tile is None:
        max_time_tile = _vmem_time_tile(tB, Fr, itemsize, stream_buffers)
    tT = _pick_time_tile(T, max_time_tile)
    frames, T_pad = _pad_time(frames, tT)
    grid = (B // tB, T_pad // tT)

    projc = proj.astype(jnp.bfloat16)                # [F, D]
    wt = jnp.transpose(w).astype(jnp.bfloat16)       # [D, E]
    b2 = b.reshape(1, E).astype(jnp.float32)

    stream_bytes = stream_buffers * tB * tT * Fr * itemsize
    const_bytes = projc.size * 2 + wt.size * 2 + b2.size * 4
    vmem_limit = _vmem_limit(stream_bytes, const_bytes, tB * E * 4, tB * Fr * 4)

    kernel = functools.partial(_triplet_fused_kernel, inv_t=1.0 / T)
    return pl.pallas_call(
        kernel,
        out_shape=jax.ShapeDtypeStruct((B, E), jnp.float32),
        grid_spec=pltpu.PrefetchScalarGridSpec(
            num_scalar_prefetch=0,
            grid=grid,
            in_specs=[
                _stream_spec((tB, tT, Fr), lambda bi, ti: (bi, ti, 0), stream_buffers),
                pl.BlockSpec((Fr, D), lambda bi, ti: (0, 0)),
                pl.BlockSpec((D, E), lambda bi, ti: (0, 0)),
                pl.BlockSpec((1, E), lambda bi, ti: (0, 0)),
            ],
            out_specs=pl.BlockSpec((tB, E), lambda bi, ti: (bi, 0)),
            scratch_shapes=[pltpu.VMEM((tB, Fr), jnp.float32)],
        ),
        compiler_params=pltpu.CompilerParams(
            dimension_semantics=("parallel", "arbitrary"),
            vmem_limit_bytes=vmem_limit),
    )(frames, projc, wt, b2)


class TripletModelPallas:
    def __init__(self, ssl_out_dim, emb_dim, frame_size, key):
        k1, k2, k3 = jax.random.split(key, 3)
        # nn.Linear(ssl_out_dim, emb_dim): weight [emb_dim, ssl_out_dim], bias [emb_dim]
        self.w = jax.random.normal(k1, (emb_dim, ssl_out_dim), jnp.float32) * 0.05
        self.b = jax.random.normal(k2, (emb_dim,), jnp.float32) * 0.01
        # deterministic stand-in SSL projection  (TODO(synk): real ssl_model is external)
        self.proj = jax.random.normal(k3, (frame_size, ssl_out_dim), jnp.float32) * 0.1
        self.frame_size = frame_size

    def __call__(self, wav, max_time_tile=None, stream_buffers=2):
        # wav: [B, 1, L]  (PyTorch forward does wav.squeeze(1))
        wav = jnp.squeeze(wav, axis=1)                         # [B, L]
        B, L = wav.shape
        T = L // self.frame_size
        frames = wav[:, : T * self.frame_size].reshape(B, T, self.frame_size)
        return triplet_fused(frames, self.proj, self.w, self.b,
                             max_time_tile=max_time_tile,
                             stream_buffers=stream_buffers)


if __name__ == "__main__":
    key = jax.random.PRNGKey(0)
    k_wav, k_model = jax.random.split(key)

    # Small but lane-dense shapes (D = E = F = 128 -> no masked partial stores).
    B = 2
    frame_size = 128
    ssl_out_dim = 128
    emb_dim = 128
    T = 16
    L = T * frame_size

    wav = jax.random.normal(k_wav, (B, 1, L), jnp.float32)
    model = TripletModelPallas(ssl_out_dim, emb_dim, frame_size, k_model)

    # Fused kernel; max_time_tile=8 forces a multi-step time grid so the
    # resident accumulator path is exercised.
    out = jax.block_until_ready(model(wav, max_time_tile=8))
    assert out.shape == (B, emb_dim)
    norms = jnp.sqrt(jnp.sum(out * out, axis=1))
    assert bool(jnp.all(jnp.abs(norms - 1.0) < 1e-3)), norms

    # Pure-JAX f32 reference of the same forward pass.
    wav2 = jnp.squeeze(wav, axis=1)
    frames = wav2[:, : T * frame_size].reshape(B, T, frame_size)
    feats = jnp.einsum("btf,fd->btd", frames, model.proj)       # stand-in SSL features

    def ref_head(f):
        x_tr = jnp.mean(f, axis=1)
        y = jnp.maximum(x_tr, 0.0) @ model.w.T + model.b
        return y / jnp.maximum(jnp.sqrt(jnp.sum(y * y, axis=1, keepdims=True)), 1e-12)

    ref = ref_head(feats)
    assert bool(jnp.all(jnp.abs(out - ref) < 5e-2)), float(jnp.max(jnp.abs(out - ref)))

    # Head-only kernel on precomputed features (streams f32 as-is, f32 accumulation;
    # bf16 only in the once-per-kernel epilogue matmul).
    head_out = jax.block_until_ready(
        triplet_head(feats, model.w, model.b, max_time_tile=8))
    assert bool(jnp.all(jnp.abs(head_out - ref) < 2e-2)), \
        float(jnp.max(jnp.abs(head_out - ref)))

    # Awkward T (no sublane-aligned divisor): exercises the zero-pad path;
    # mean still divides by the true T.
    T2 = 12
    feats12 = feats[:, :T2, :]
    head12 = jax.block_until_ready(
        triplet_head(feats12, model.w, model.b, max_time_tile=8))
    ref12 = ref_head(feats12)
    assert bool(jnp.all(jnp.abs(head12 - ref12) < 2e-2)), \
        float(jnp.max(jnp.abs(head12 - ref12)))

    print("KERNEL_OK")
</pallas_src>

<mosaic_0001>
module attributes {stable_mosaic.version = 11 : i64} {
  func.func @_triplet_fused_kernel(%arg0: i32, %arg1: i32, %arg2: memref<2x8x128xf32, #tpu.memory_space<vmem>>, %arg3: memref<128x128xbf16, #tpu.memory_space<vmem>>, %arg4: memref<128x128xbf16, #tpu.memory_space<vmem>>, %arg5: memref<1x128xf32, #tpu.memory_space<vmem>>, %arg6: memref<2x128xf32, #tpu.memory_space<vmem>>, %arg7: memref<2x128xf32, #tpu.memory_space<vmem>>) attributes {dimension_semantics = [#tpu.dimension_semantics<parallel>, #tpu.dimension_semantics<arbitrary>], iteration_bounds = array<i64: 1, 2>, scalar_prefetch = 0 : i64, scratch_operands = 1 : i64, tpu.core_type = #tpu.core_type<tc>, window_params = [{transform_indices = @transform_0, window_bounds = array<i64: 2, 8, 128>}, {pipeline_mode = #tpu.pipeline_mode<synchronous>, transform_indices = @transform_1, window_bounds = array<i64: 128, 128>}, {pipeline_mode = #tpu.pipeline_mode<synchronous>, transform_indices = @transform_2, window_bounds = array<i64: 128, 128>}, {pipeline_mode = #tpu.pipeline_mode<synchronous>, transform_indices = @transform_3, window_bounds = array<i64: 1, 128>}, {transform_indices = @transform_4, window_bounds = array<i64: 2, 128>}]} {
    %c0_i32 = arith.constant 0 : i32
    %0 = arith.cmpi eq, %arg1, %c0_i32 : i32
    %1 = arith.extui %0 : i1 to i32
    %c0_i32_0 = arith.constant 0 : i32
    %2 = arith.cmpi ne, %1, %c0_i32_0 : i32
    scf.if %2 {
      %cst_8 = arith.constant 0.000000e+00 : f32
      %11 = vector.broadcast %cst_8 : f32 to vector<2x128xf32>
      %c0_9 = arith.constant 0 : index
      %c0_10 = arith.constant 0 : index
      %12 = vector.load %arg7[%c0_9, %c0_10] : memref<2x128xf32, #tpu.memory_space<vmem>>, vector<2x128xf32>
      tpu.vector_store %arg7[%c0_9, %c0_10], %11 {strides = array<i32>} : memref<2x128xf32, #tpu.memory_space<vmem>>, vector<2x128xf32>,
    } else {
    }
    %c0 = arith.constant 0 : index
    %c0_1 = arith.constant 0 : index
    %3 = vector.load %arg7[%c0, %c0_1] : memref<2x128xf32, #tpu.memory_space<vmem>>, vector<2x128xf32>
    %c0_2 = arith.constant 0 : index
    %c0_3 = arith.constant 0 : index
    %c0_4 = arith.constant 0 : index
    %4 = vector.load %arg2[%c0_2, %c0_3, %c0_4] : memref<2x8x128xf32, #tpu.memory_space<vmem>>, vector<2x8x128xf32>
    %cst = arith.constant dense<0.000000e+00> : vector<2x128xf32>
    %5 = vector.multi_reduction <add>, %4, %cst [1] : vector<2x8x128xf32> to vector<2x128xf32>
    %6 = arith.addf %3, %5 : vector<2x128xf32>
    %c0_5 = arith.constant 0 : index
    %c0_6 = arith.constant 0 : index
    %7 = vector.load %arg7[%c0_5, %c0_6] : memref<2x128xf32, #tpu.memory_space<vmem>>, vector<2x128xf32>
    tpu.vector_store %arg7[%c0_5, %c0_6], %6 {strides = array<i32>} : memref<2x128xf32, #tpu.memory_space<vmem>>, vector<2x128xf32>,
    %c1_i32 = arith.constant 1 : i32
    %8 = arith.cmpi eq, %arg1, %c1_i32 : i32
    %9 = arith.extui %8 : i1 to i32
    %c0_i32_7 = arith.constant 0 : i32
    %10 = arith.cmpi ne, %9, %c0_i32_7 : i32
    scf.if %10 {
      %c0_8 = arith.constant 0 : index
      %c0_9 = arith.constant 0 : index
      %11 = vector.load %arg7[%c0_8, %c0_9] : memref<2x128xf32, #tpu.memory_space<vmem>>, vector<2x128xf32>
      %cst_10 = arith.constant 6.250000e-02 : f32
      %12 = vector.broadcast %cst_10 : f32 to vector<2x128xf32>
      %13 = arith.mulf %11, %12 : vector<2x128xf32>
      %14 = arith.truncf %13 : vector<2x128xf32> to vector<2x128xbf16>
      %c0_11 = arith.constant 0 : index
      %c0_12 = arith.constant 0 : index
      %15 = vector.load %arg3[%c0_11, %c0_12] : memref<128x128xbf16, #tpu.memory_space<vmem>>, vector<128x128xbf16>
      %cst_13 = arith.constant dense<0.000000e+00> : vector<2x128xf32>
      %16 = tpu.matmul %14, %15, %cst_13 {dimension_numbers = #tpu.dot_dimension_numbers<[1], [0], [0], [1], [0, 0, 1, 1], [], []>} : vector<2x128xbf16>, vector<128x128xbf16>, vector<2x128xf32> -> vector<2x128xf32>
      %cst_14 = arith.constant 0.000000e+00 : f32
      %17 = vector.broadcast %cst_14 : f32 to vector<2x128xf32>
      %18 = arith.maximumf %16, %17 : vector<2x128xf32>
      %19 = arith.truncf %18 : vector<2x128xf32> to vector<2x128xbf16>
      %c0_15 = arith.constant 0 : index
      %c0_16 = arith.constant 0 : index
      %20 = vector.load %arg4[%c0_15, %c0_16] : memref<128x128xbf16, #tpu.memory_space<vmem>>, vector<128x128xbf16>
      %cst_17 = arith.constant dense<0.000000e+00> : vector<2x128xf32>
      %21 = tpu.matmul %19, %20, %cst_17 {dimension_numbers = #tpu.dot_dimension_numbers<[1], [0], [0], [1], [0, 0, 1, 1], [], []>} : vector<2x128xbf16>, vector<128x128xbf16>, vector<2x128xf32> -> vector<2x128xf32>
      %c0_18 = arith.constant 0 : index
      %c0_19 = arith.constant 0 : index
      %22 = vector.load %arg5[%c0_18, %c0_19] : memref<1x128xf32, #tpu.memory_space<vmem>>, vector<1x128xf32>
      %23 = vector.broadcast %22 : vector<1x128xf32> to vector<2x128xf32>
      %24 = arith.addf %21, %23 : vector<2x128xf32>
      %25 = arith.mulf %24, %24 : vector<2x128xf32>
      %cst_20 = arith.constant dense<0.000000e+00> : vector<2xf32>
      %26 = vector.multi_reduction <add>, %25, %cst_20 [1] : vector<2x128xf32> to vector<2xf32>
      %27 = vector.shape_cast %26 : vector<2xf32> to vector<2x1xf32>
      %cst_21 = arith.constant 1.000000e-24 : f32
      %28 = vector.broadcast %cst_21 : f32 to vector<2x1xf32>
      %29 = arith.maximumf %27, %28 : vector<2x1xf32>
      %30 = math.rsqrt %29 : vector<2x1xf32>
      %31 = vector.broadcast %30 : vector<2x1xf32> to vector<2x128xf32>
      %32 = arith.mulf %24, %31 : vector<2x128xf32>
      %c0_22 = arith.constant 0 : index
      %c0_23 = arith.constant 0 : index
      %33 = vector.load %arg6[%c0_22, %c0_23] : memref<2x128xf32, #tpu.memory_space<vmem>>, vector<2x128xf32>
      tpu.vector_store %arg6[%c0_22, %c0_23], %32 {strides = array<i32>} : memref<2x128xf32, #tpu.memory_space<vmem>>, vector<2x128xf32>,
    } else {
    }
    return
  }
  func.func @transform_0(%arg0: i32, %arg1: i32) -> (i32, i32, i32) {
    %c0_i32 = arith.constant 0 : i32
    %c0_i32_0 = arith.constant 0 : i32
    return %arg0, %arg1, %c0_i32 : i32, i32, i32
  }
  func.func @transform_1(%arg0: i32, %arg1: i32) -> (i32, i32) {
    %c0_i32 = arith.constant 0 : i32
    %c0_i32_0 = arith.constant 0 : i32
    %c0_i32_1 = arith.constant 0 : i32
    return %c0_i32, %c0_i32_0 : i32, i32
  }
  func.func @transform_2(%arg0: i32, %arg1: i32) -> (i32, i32) {
    %c0_i32 = arith.constant 0 : i32
    %c0_i32_0 = arith.constant 0 : i32
    %c0_i32_1 = arith.constant 0 : i32
    return %c0_i32, %c0_i32_0 : i32, i32
  }
  func.func @transform_3(%arg0: i32, %arg1: i32) -> (i32, i32) {
    %c0_i32 = arith.constant 0 : i32
    %c0_i32_0 = arith.constant 0 : i32
    %c0_i32_1 = arith.constant 0 : i32
    return %c0_i32, %c0_i32_0 : i32, i32
  }
  func.func @transform_4(%arg0: i32, %arg1: i32) -> (i32, i32) {
    %c0_i32 = arith.constant 0 : i32
    %c0_i32_0 = arith.constant 0 : i32
    return %arg0, %c0_i32 : i32, i32
  }
}

</mosaic_0001>

<llo_original>
// kernel: tpu_custom_call.1
$region0: #{tpu_custom_call.1}
  #allocation0 [shape = 'u32[]', space=smem, size = 0x4, offset = 0x4, fixed_abs, tag = 'smem constant byte address 0x4 - core index']
  #allocation1 [shape = 'u32[144,128]{1,0:T(1,128)}', space=vmem, size = 0x12000, scoped, tag = 'internal scratch']
  #allocation2 [shape = 'f32[2,128]{1,0:T(2,128)}', space=vmem, size = 0x400, scoped, tag = 'scratch operand']
  %s0 = inlined_call_operand.hbm [shape: f32[2,16,128], index: 0, kind: input, shape index: {}]
  %s1 = inlined_call_operand.hbm [shape: bf16[128,128], index: 1, kind: input, shape index: {}]
  %s2 = inlined_call_operand.hbm [shape: bf16[128,128], index: 2, kind: input, shape index: {}]
  %s3 = inlined_call_operand.vmem [shape: f32[1,128], index: 3, kind: input, shape index: {}]
  %s4 = inlined_call_operand.hbm [shape: f32[2,128], index: 4, kind: output, shape index: {}]
  %s5 = sld [smem:[#allocation0]]
  $region69: #{tpu_custom_call.1} parent=0
    _
  %s7 = ssub.s32 1, %s5
  %s8 = scalar_select 0, %s7, %s5
  $region1: #{tpu_custom_call.1} parent=0
    #allocation3 [shape = 'u8[16384]{0}', space=vmem, size = 0x4000, scoped, tag = 'input window, operand 0']
    #allocation4 [shape = 's32[2]{0}', space=sflag, size = 0x8, scoped, tag = 'scoped memory for tpu_custom_call.1']
    #allocation5 [shape = 's32[2]{0}', space=sflag, size = 0x8, scoped, tag = 'scoped memory for tpu_custom_call.1']
    #allocation6 [shape = 'u8[32768]{0}', space=vmem, size = 0x8000, scoped, tag = 'input window, operand 1, single buffered']
    #allocation7 [shape = 's32[1]{0}', space=sflag, size = 0x4, scoped, tag = 'scoped memory for tpu_custom_call.1']
    #allocation8 [shape = 'u8[32768]{0}', space=vmem, size = 0x8000, scoped, tag = 'input window, operand 2, single buffered']
    #allocation9 [shape = 'u8[1024]{0}', space=vmem, size = 0x400, scoped, tag = 'output window, operand 0, single buffered']
    %9 = vsyncpa [#allocation4], 0
    %s10 = scalar_lea.sflag [#allocation4], 1
    %11 = vsyncpa %s10, 0
    %12 = vsyncpa [#allocation7], 0
    %13 = vsyncpa [#allocation5], 0
    loop: start=0, step=1, limit=4
    $region2: #{tpu_custom_call.1} parent=1 // loop_pre_header
      _
    $region3: #{tpu_custom_call.1} parent=1 // loop_header
      %s15 = sphi 0, %s19
      %p16 = scmp.ge.s32.totalorder %s15, 4
      %s22 = sphi 0, %s34
      %s23 = sphi 0, %s30
      %s24 = sphi 0, %s22
      %s25 = sphi 0, %s23
      %s26 = sphi 0, %s24
      %s27 = sphi 0, %s25
      %s39 = sphi 0, %s41
      %s42 = sphi 0, %s39
      %s43 = sphi 0, %s42
      %s59 = sphi 0, %s43
      %s63 = sphi 0, %s63
      %s65 = sphi 0, %s63
      %s66 = sphi 0, %s65
      %s80 = sphi 0, %s66
      %s84 = sphi 0, %s84
      %s86 = sphi 0, %s84
      %s87 = sphi 0, %s86
      %s101 = sphi 0, %s87
      %s105 = sphi 0, %s105
      %s107 = sphi 0, %s105
      %s108 = sphi 0, %s107
      %s122 = sphi 0, %s108
      %s128 = sphi 0, %s130
      %s131 = sphi 0, %s128
      %s132 = sphi 0, %s131
      %s148 = sphi 0, %s132
    $region4: #{tpu_custom_call.1} parent=1 // loop_header_branch
      %18 = sbr.rel (%p16) target = $region8
    $region5: #{tpu_custom_call.1} parent=1 // loop_body
      %s20 = ssub.s32 %s15, 1
      %s21 = ssub.s32 %s15, 2
      %s28 = sadd.s32 1, %s23
      %p29 = scmp.ge.s32.totalorder %s28, 2
      %s30 = scalar_select %p29, 0, %s28
      %s31 = sadd.s32 1, %s22
      %s32 = scalar_select %p29, %s31, %s22
      %p33 = scmp.ge.s32.totalorder %s32, 1
      %s34 = scalar_select %p33, 0, %s32
      %s35 = ssub.s32 %s22, %s34
      %s36 = ssub.s32 %s23, %s30
      %s37 = sor.u32 %s35, %s36
      %p38 = scmp.eq.s32.totalorder %s37, 0
      %s40 = sadd.s32 %s39, 1
      %s41 = scalar_select %p38, %s39, %s40
      %p44 = pneg %p38
      %p45 = scmp.eq.s32.totalorder %s15, 1
      %p46 = por %p44, %p45
      %p47 = scmp.ne.s32.totalorder %s39, %s42
      %p48 = scmp.eq.s32.totalorder %s15, 0
      %p49 = por %p47, %p48
      %p50 = scmp.ne.s32.totalorder %s39, %s42
      %p51 = scmp.eq.s32.totalorder %s20, 1
      %p52 = por %p50, %p51
      %p53 = scmp.ne.s32.totalorder %s42, %s43
      %p54 = scmp.eq.s32.totalorder %s20, 0
      %p55 = por %p53, %p54
      %p56 = scmp.ne.s32.totalorder %s42, %s43
      %p57 = scmp.eq.s32.totalorder %s21, 1
      %p58 = por %p56, %p57
      %p60 = scmp.ne.s32.totalorder %s43, %s59
      %p61 = scmp.eq.s32.totalorder %s21, 0
      %p62 = por %p60, %p61
      %s64 = sadd.s32 %s63, 1
      %p67 = scmp.eq.s32.totalorder %s15, 1
      %p68 = scmp.ne.s32.totalorder %s63, %s65
      %p69 = scmp.eq.s32.totalorder %s15, 0
      %p70 = por %p68, %p69
      %p71 = scmp.ne.s32.totalorder %s63, %s65
      %p72 = scmp.eq.s32.totalorder %s20, 1
      %p73 = por %p71, %p72
      %p74 = scmp.ne.s32.totalorder %s65, %s66
      %p75 = scmp.eq.s32.totalorder %s20, 0
      %p76 = por %p74, %p75
      %p77 = scmp.ne.s32.totalorder %s65, %s66
      %p78 = scmp.eq.s32.totalorder %s21, 1
      %p79 = por %p77, %p78
      %p81 = scmp.ne.s32.totalorder %s66, %s80
      %p82 = scmp.eq.s32.totalorder %s21, 0
      %p83 = por %p81, %p82
      %s85 = sadd.s32 %s84, 1
      %p88 = scmp.eq.s32.totalorder %s15, 1
      %p89 = scmp.ne.s32.totalorder %s84, %s86
      %p90 = scmp.eq.s32.totalorder %s15, 0
      %p91 = por %p89, %p90
      %p92 = scmp.ne.s32.totalorder %s84, %s86
      %p93 = scmp.eq.s32.totalorder %s20, 1
      %p94 = por %p92, %p93
      %p95 = scmp.ne.s32.totalorder %s86, %s87
      %p96 = scmp.eq.s32.totalorder %s20, 0
      %p97 = por %p95, %p96
      %p98 = scmp.ne.s32.totalorder %s86, %s87
      %p99 = scmp.eq.s32.totalorder %s21, 1
      %p100 = por %p98, %p99
      %p102 = scmp.ne.s32.totalorder %s87, %s101
      %p103 = scmp.eq.s32.totalorder %s21, 0
      %p104 = por %p102, %p103
      %s106 = sadd.s32 %s105, 1
      %p109 = scmp.eq.s32.totalorder %s15, 1
      %p110 = scmp.ne.s32.totalorder %s105, %s107
      %p111 = scmp.eq.s32.totalorder %s15, 0
      %p112 = por %p110, %p111
      %p113 = scmp.ne.s32.totalorder %s105, %s107
      %p114 = scmp.eq.s32.totalorder %s20, 1
      %p115 = por %p113, %p114
      %p116 = scmp.ne.s32.totalorder %s107, %s108
      %p117 = scmp.eq.s32.totalorder %s20, 0
      %p118 = por %p116, %p117
      %p119 = scmp.ne.s32.totalorder %s107, %s108
      %p120 = scmp.eq.s32.totalorder %s21, 1
      %p121 = por %p119, %p120
      %p123 = scmp.ne.s32.totalorder %s108, %s122
      %p124 = scmp.eq.s32.totalorder %s21, 0
      %p125 = por %p123, %p124
      %s126 = ssub.s32 %s22, %s34
      %p127 = scmp.eq.s32.totalorder %s126, 0
      %s129 = sadd.s32 %s128, 1
      %s130 = scalar_select %p127, %s128, %s129
      %p133 = pneg %p127
      %p134 = scmp.eq.s32.totalorder %s15, 1
      %p135 = por %p133, %p134
      %p136 = scmp.ne.s32.totalorder %s128, %s131
      %p137 = scmp.eq.s32.totalorder %s15, 0
      %p138 = por %p136, %p137
      %p139 = scmp.ne.s32.totalorder %s128, %s131
      %p140 = scmp.eq.s32.totalorder %s20, 1
      %p141 = por %p139, %p140
      %p142 = scmp.ne.s32.totalorder %s131, %s132
      %p143 = scmp.eq.s32.totalorder %s20, 0
      %p144 = por %p142, %p143
      %p145 = scmp.ne.s32.totalorder %s131, %s132
      %p146 = scmp.eq.s32.totalorder %s21, 1
      %p147 = por %p145, %p146
      %p149 = scmp.ne.s32.totalorder %s132, %s148
      %p150 = scmp.eq.s32.totalorder %s21, 0
      %p151 = por %p149, %p150
      %p152 = scmp.le.s32.totalorder 1, %s15
      %p153 = scmp.lt.s32.totalorder %s15, 3
      %p154 = pnand %p152, %p153
      %p155 = pneg %p154
      // Predicated region
      $region9: #{tpu_custom_call.1} parent=5 // pred_check
        _
      $region10: #{tpu_custom_call.1} parent=5 // pred_check_branch
        %157 = sbr.rel (%p154) target = $region12
      $region11: #{tpu_custom_call.1} parent=5 // pred_region
        %s158 = ssub.s32 %s15, 1
        // Predicated region
        $region13: #{tpu_custom_call.1} parent=11 // pred_check
          %p159 = pneg %p76
        $region14: #{tpu_custom_call.1} parent=11 // pred_check_branch
          %161 = sbr.rel (%p159) target = $region16
        $region15: #{tpu_custom_call.1} parent=11 // pred_region
          %s163 = ssub.s32 1024, 1024
          %164 = vsyncadd [#allocation7], %s163
          %s165 = sshll.u32 [#allocation6], 4
          %s166 = int_to_ptr.vmem [resolvable:$true] %s165
          %171 = dma.hbm_to_vmem [thread:$0]  %s1, 1024, %s166, [#allocation7], 64, 64, 4
        $region16: #{tpu_custom_call.1} parent=11 // pred_fallthru
          _
        // Predicated region
        $region17: #{tpu_custom_call.1} parent=11 // pred_check
          %p172 = pneg %p97
        $region18: #{tpu_custom_call.1} parent=11 // pred_check_branch
          %174 = sbr.rel (%p172) target = $region20
        $region19: #{tpu_custom_call.1} parent=11 // pred_region
          %s176 = ssub.s32 1024, 1024
          %177 = vsyncadd [#allocation7], %s176
          %s178 = sshll.u32 [#allocation8], 4
          %s179 = int_to_ptr.vmem [resolvable:$true] %s178
          %184 = dma.hbm_to_vmem [thread:$0]  %s2, 1024, %s179, [#allocation7], 64, 64, 4
        $region20: #{tpu_custom_call.1} parent=11 // pred_fallthru
          _
        // Predicated region
        $region21: #{tpu_custom_call.1} parent=11 // pred_check
          %p185 = pneg %p118
        $region22: #{tpu_custom_call.1} parent=11 // pred_check_branch
          %187 = sbr.rel (%p185) target = $region24
        $region23: #{tpu_custom_call.1} parent=11 // pred_region
          _
        $region24: #{tpu_custom_call.1} parent=11 // pred_fallthru
          _
      $region12: #{tpu_custom_call.1} parent=5 // pred_fallthru
        _
      %p188 = scmp.lt.s32.totalorder %s15, 2
      // Predicated region
      $region25: #{tpu_custom_call.1} parent=5 // pred_check
        %p189 = pneg %p188
      $region26: #{tpu_custom_call.1} parent=5 // pred_check_branch
        %191 = sbr.rel (%p189) target = $region28
      $region27: #{tpu_custom_call.1} parent=5 // pred_region
        // Predicated region
        $region29: #{tpu_custom_call.1} parent=27 // pred_check
          %p192 = pneg %p49
        $region30: #{tpu_custom_call.1} parent=27 // pred_check_branch
          %194 = sbr.rel (%p192) target = $region32
        $region31: #{tpu_custom_call.1} parent=27 // pred_region
          %s195 = sand.u32 %s39, 1
          %s196 = scalar_lea.sflag [#allocation4], %s195
          %s197 = sand.u32 %s39, 1
          %s198 = smul.addr %s197, 16
          %s199 = scalar_lea.vmem [#allocation3], %s198
          %s200 = smul.u32 2, %s22
          %s202 = ssub.s32 256, 256
          %203 = vsyncadd %s196, %s202
          %s204 = smul.addr %s200, 2
          %s205 = sadd.s32 %s23, %s204
          %s206 = smul.addr %s205, 128
          %s207 = scalar_lea.hbm %s0, %s206
          %s208 = sshll.u32 %s199, 4
          %s209 = int_to_ptr.vmem [resolvable:$true] %s208
          %214 = dma.hbm_to_vmem [thread:$0]  %s207, 256, %s209, %s196, 256, 128, 8
        $region32: #{tpu_custom_call.1} parent=27 // pred_fallthru
          _
      $region28: #{tpu_custom_call.1} parent=5 // pred_fallthru
        _
      %p215 = scmp.le.s32.totalorder 1, %s15
      %p216 = scmp.lt.s32.totalorder %s15, 3
      %p217 = pnand %p215, %p216
      %p218 = pneg %p217
      // Predicated region
      $region33: #{tpu_custom_call.1} parent=5 // pred_check
        _
      $region34: #{tpu_custom_call.1} parent=5 // pred_check_branch
        %220 = sbr.rel (%p217) target = $region36
      $region35: #{tpu_custom_call.1} parent=5 // pred_region
        %s221 = ssub.s32 %s15, 1
        %s222 = sand.u32 %s42, 1
        %s223 = scalar_lea.sflag [#allocation4], %s222
        %s224 = sand.u32 %s42, 1
        %s225 = smul.addr %s224, 16
        %s226 = scalar_lea.vmem [#allocation3], %s225
        // Predicated region
        $region37: #{tpu_custom_call.1} parent=35 // pred_check
          %p227 = pneg %p55
        $region38: #{tpu_custom_call.1} parent=35 // pred_check_branch
          %229 = sbr.rel (%p227) target = $region40
        $region39: #{tpu_custom_call.1} parent=35 // pred_region
          %230 = dma.done %s223, 256
        $region40: #{tpu_custom_call.1} parent=35 // pred_fallthru
          _
        // Predicated region
        $region41: #{tpu_custom_call.1} parent=35 // pred_check
          %p231 = pneg %p76
        $region42: #{tpu_custom_call.1} parent=35 // pred_check_branch
          %233 = sbr.rel (%p231) target = $region44
        $region43: #{tpu_custom_call.1} parent=35 // pred_region
          %234 = dma.done [#allocation7], 1024
        $region44: #{tpu_custom_call.1} parent=35 // pred_fallthru
          _
        // Predicated region
        $region45: #{tpu_custom_call.1} parent=35 // pred_check
          %p235 = pneg %p97
        $region46: #{tpu_custom_call.1} parent=35 // pred_check_branch
          %237 = sbr.rel (%p235) target = $region48
        $region47: #{tpu_custom_call.1} parent=35 // pred_region
          %238 = dma.done [#allocation7], 1024
        $region48: #{tpu_custom_call.1} parent=35 // pred_fallthru
          _
        %s239 = sand.u32 %s42, 1
        %s240 = scalar_lea.sflag [#allocation4], %s239
        %s241 = sand.u32 %s42, 1
        %s242 = smul.addr %s241, 16
        %s243 = scalar_lea.vmem [#allocation3], %s242
        %p244 = pneg %p55
        %p245 = pneg %p52
        %p246 = pneg %p76
        %p247 = pneg %p73
        %p248 = pneg %p97
        %p249 = pneg %p94
        %p250 = pneg %p118
        %p251 = pneg %p115
        %p252 = pneg %p144
        %p253 = pneg %p141
        %s254 = smul.u32 2, %s24
        %p256 = scmp.eq.s32.totalorder %s25, 0
        // Predicated region
        $region49: #{tpu_custom_call.1} parent=35 // pred_check
          %p257 = pneg %p256
        $region50: #{tpu_custom_call.1} parent=35 // pred_check_branch
          %259 = sbr.rel (%p257) target = $region52
        $region51: #{tpu_custom_call.1} parent=35 // pred_region
          %260 = vst [vmem:[#allocation2] sm:$0x3] 0.0
        $region52: #{tpu_custom_call.1} parent=35 // pred_fallthru
          _
        %v261 = vld [vmem:[#allocation2] sm:$0x3]
        %v262 = vld [vmem:[%s226] sm:$0xff]
        %v263 = vld [vmem:[%s226 + $0x8] sm:$0xff]
        %v264 = vrot.slane %v262, 4
        %v265 = vadd.f32 %v262, %v264
        %v266 = vrot.slane %v265, 2
        %v267 = vadd.f32 %v265, %v266
        %v268 = vrot.slane %v267, 1
        %v269 = vadd.f32 %v267, %v268
        %v270 = vrot.slane %v263, 4
        %v271 = vadd.f32 %v263, %v270
        %v272 = vrot.slane %v271, 2
        %v273 = vadd.f32 %v271, %v272
        %v274 = vrot.slane %v273, 1
        %v275 = vadd.f32 %v273, %v274
        %vm278 = vcmask 1041409
        %v279 = vsel %vm278, %v275, %v269
        %v281 = vadd.f32 %v261, %v279
        %282 = vst [vmem:[#allocation2] sm:$0x3] %v281
        %p283 = scmp.eq.s32.totalorder %s25, 1
        // Predicated region
        $region53: #{tpu_custom_call.1} parent=35 // pred_check
          %p284 = pneg %p283
        $region54: #{tpu_custom_call.1} parent=35 // pred_check_branch
          %286 = sbr.rel (%p284) target = $region56
        $region55: #{tpu_custom_call.1} parent=35 // pred_region
          %v287 = vld [vmem:[#allocation2] sm:$0x3]
          %v288 = vmul.f32 %v287, 0.0625
          %v289 = vpack.c.bf16 %v288, %v288
          %v290 = vld [vmem:[#allocation6] sm:$0xf]
          %v291 = vld [vmem:[#allocation6 + $0x4] sm:$0xf]
          %v292 = vld [vmem:[#allocation6 + $0x8] sm:$0xf]
          %v293 = vld [vmem:[#allocation6 + $0xc] sm:$0xf]
          %v294 = vld [vmem:[#allocation6 + $0x10] sm:$0xf]
          %v295 = vld [vmem:[#allocation6 + $0x14] sm:$0xf]
          %v296 = vld [vmem:[#allocation6 + $0x18] sm:$0xf]
          %v297 = vld [vmem:[#allocation6 + $0x1c] sm:$0xf]
          %v298 = vld [vmem:[#allocation6 + $0x20] sm:$0xf]
          %v299 = vld [vmem:[#allocation6 + $0x24] sm:$0xf]
          %v300 = vld [vmem:[#allocation6 + $0x28] sm:$0xf]
          %v301 = vld [vmem:[#allocation6 + $0x2c] sm:$0xf]
          %v302 = vld [vmem:[#allocation6 + $0x30] sm:$0xf]
          %v303 = vld [vmem:[#allocation6 + $0x34] sm:$0xf]
          %v304 = vld [vmem:[#allocation6 + $0x38] sm:$0xf]
          %v305 = vld [vmem:[#allocation6 + $0x3c] sm:$0xf]
          %v322 = vunpack.c.l.b16 %v290
          %v323 = vunpack.c.l.b16 %v291
          %v324 = vunpack.c.l.b16 %v292
          %v325 = vunpack.c.l.b16 %v293
          %v326 = vunpack.c.l.b16 %v294
          %v327 = vunpack.c.l.b16 %v295
          %v328 = vunpack.c.l.b16 %v296
          %v329 = vunpack.c.l.b16 %v297
          %v330 = vunpack.c.l.b16 %v298
          %v331 = vunpack.c.l.b16 %v299
          %v332 = vunpack.c.l.b16 %v300
          %v333 = vunpack.c.l.b16 %v301
          %v334 = vunpack.c.l.b16 %v302
          %v335 = vunpack.c.l.b16 %v303
          %v336 = vunpack.c.l.b16 %v304
          %v337 = vunpack.c.l.b16 %v305
          %v338 = vpack.c.b16 %v323, %v322
          %v339 = vpack.c.b16 %v325, %v324
          %v340 = vpack.c.b16 %v327, %v326
          %v341 = vpack.c.b16 %v329, %v328
          %v342 = vpack.c.b16 %v331, %v330
          %v343 = vpack.c.b16 %v333, %v332
          %v344 = vpack.c.b16 %v335, %v334
          %v345 = vpack.c.b16 %v337, %v336
          %354 = vmatprep.subr.bf16.mxu0 0
          %355 = vmatpush1.bf16.msra.mxu0 %v345
          %356 = vmatprep.subr.bf16.mxu0 0
          %357 = vmatpush1.bf16.msra.mxu0 %v344
          %358 = vmatprep.subr.bf16.mxu0 0
          %359 = vmatpush1.bf16.msra.mxu0 %v343
          %360 = vmatprep.subr.bf16.mxu0 0
          %361 = vmatpush1.bf16.msra.mxu0 %v342
          %362 = vmatprep.subr.bf16.mxu0 0
          %363 = vmatpush1.bf16.msra.mxu0 %v341
          %364 = vmatprep.subr.bf16.mxu0 0
          %365 = vmatpush1.bf16.msra.mxu0 %v340
          %366 = vmatprep.subr.bf16.mxu0 0
          %367 = vmatpush1.bf16.msra.mxu0 %v339
          %368 = vmatprep.subr.bf16.mxu0 0
          %369 = vmatpush1.bf16.msra.mxu0 %v338
          %370 = vmatprep.subr.bf16.mxu0 0
          %371 = vmatpush2.bf16.msra.mxu0 0
          %372 = vmatprep.subr.bf16.mxu0 0
          %373 = vmatpush2.bf16.msra.mxu0 0
          %374 = vmatprep.subr.bf16.mxu0 0
          %375 = vmatpush2.bf16.msra.mxu0 0
          %376 = vmatprep.subr.bf16.mxu0 0
          %377 = vmatpush2.bf16.msra.mxu0 0
          %378 = vmatprep.subr.bf16.mxu0 0
          %379 = vmatpush2.bf16.msra.mxu0 0
          %380 = vmatprep.subr.bf16.mxu0 0
          %381 = vmatpush2.bf16.msra.mxu0 0
          %382 = vmatprep.subr.bf16.mxu0 0
          %383 = vmatpush2.bf16.msra.mxu0 0
          %384 = vmatprep.subr.bf16.mxu0 0
          %385 = vmatpush2.bf16.msra.mxu0 0
          %386 = vmatprep.mubr.bf16.mxu0 0
          %387 = vmatmul.mubr.bf16.gmra.mxu0 %v289
          %v388 = vpop.f32.mrf.mxu0
          %v389 = vadd.f32 0.0, %v388
          %v390 = vpop.f32.mrf.mxu0
          %v391 = vpop.f32.mrf.mxu0
          %v392 = vpop.f32.mrf.mxu0
          %393 = vdwg.mxu0
          %v394 = vmax.f32 %v389, 0.0
          %v395 = vpack.c.bf16 %v394, %v394
          %v396 = vld [vmem:[#allocation8] sm:$0xf]
          %v397 = vld [vmem:[#allocation8 + $0x4] sm:$0xf]
          %v398 = vld [vmem:[#allocation8 + $0x8] sm:$0xf]
          %v399 = vld [vmem:[#allocation8 + $0xc] sm:$0xf]
          %v400 = vld [vmem:[#allocation8 + $0x10] sm:$0xf]
          %v401 = vld [vmem:[#allocation8 + $0x14] sm:$0xf]
          %v402 = vld [vmem:[#allocation8 + $0x18] sm:$0xf]
          %v403 = vld [vmem:[#allocation8 + $0x1c] sm:$0xf]
          %v404 = vld [vmem:[#allocation8 + $0x20] sm:$0xf]
          %v405 = vld [vmem:[#allocation8 + $0x24] sm:$0xf]
          %v406 = vld [vmem:[#allocation8 + $0x28] sm:$0xf]
          %v407 = vld [vmem:[#allocation8 + $0x2c] sm:$0xf]
          %v408 = vld [vmem:[#allocation8 + $0x30] sm:$0xf]
          %v409 = vld [vmem:[#allocation8 + $0x34] sm:$0xf]
          %v410 = vld [vmem:[#allocation8 + $0x38] sm:$0xf]
          %v411 = vld [vmem:[#allocation8 + $0x3c] sm:$0xf]
          %v412 = vld [vmem:[%s3] sm:$0x1]
          %v414 = vlaneseq
          %v415 = vshrl.u32 %v414, 7
          %v416 = vsub.s32 0, %v415
          %v417 = vrot.slane %v412, %v416
          %v435 = vunpack.c.l.b16 %v396
          %v436 = vunpack.c.l.b16 %v397
          %v437 = vunpack.c.l.b16 %v398
          %v438 = vunpack.c.l.b16 %v399
          %v439 = vunpack.c.l.b16 %v400
          %v440 = vunpack.c.l.b16 %v401
          %v441 = vunpack.c.l.b16 %v402
          %v442 = vunpack.c.l.b16 %v403
          %v443 = vunpack.c.l.b16 %v404
          %v444 = vunpack.c.l.b16 %v405
          %v445 = vunpack.c.l.b16 %v406
          %v446 = vunpack.c.l.b16 %v407
          %v447 = vunpack.c.l.b16 %v408
          %v448 = vunpack.c.l.b16 %v409
          %v449 = vunpack.c.l.b16 %v410
          %v450 = vunpack.c.l.b16 %v411
          %v451 = vpack.c.b16 %v436, %v435
          %v452 = vpack.c.b16 %v438, %v437
          %v453 = vpack.c.b16 %v440, %v439
          %v454 = vpack.c.b16 %v442, %v441
          %v455 = vpack.c.b16 %v444, %v443
          %v456 = vpack.c.b16 %v446, %v445
          %v457 = vpack.c.b16 %v448, %v447
          %v458 = vpack.c.b16 %v450, %v449
          %467 = vmatprep.subr.bf16.mxu0 0
          %468 = vmatpush1.bf16.msra.mxu0 %v458
          %469 = vmatprep.subr.bf16.mxu0 0
          %470 = vmatpush1.bf16.msra.mxu0 %v457
          %471 = vmatprep.subr.bf16.mxu0 0
          %472 = vmatpush1.bf16.msra.mxu0 %v456
          %473 = vmatprep.subr.bf16.mxu0 0
          %474 = vmatpush1.bf16.msra.mxu0 %v455
          %475 = vmatprep.subr.bf16.mxu0 0
          %476 = vmatpush1.bf16.msra.mxu0 %v454
          %477 = vmatprep.subr.bf16.mxu0 0
          %478 = vmatpush1.bf16.msra.mxu0 %v453
          %479 = vmatprep.subr.bf16.mxu0 0
          %480 = vmatpush1.bf16.msra.mxu0 %v452
          %481 = vmatprep.subr.bf16.mxu0 0
          %482 = vmatpush1.bf16.msra.mxu0 %v451
          %483 = vmatprep.subr.bf16.mxu0 0
          %484 = vmatpush2.bf16.msra.mxu0 0
          %485 = vmatprep.subr.bf16.mxu0 0
          %486 = vmatpush2.bf16.msra.mxu0 0
          %487 = vmatprep.subr.bf16.mxu0 0
          %488 = vmatpush2.bf16.msra.mxu0 0
          %489 = vmatprep.subr.bf16.mxu0 0
          %490 = vmatpush2.bf16.msra.mxu0 0
          %491 = vmatprep.subr.bf16.mxu0 0
          %492 = vmatpush2.bf16.msra.mxu0 0
          %493 = vmatprep.subr.bf16.mxu0 0
          %494 = vmatpush2.bf16.msra.mxu0 0
          %495 = vmatprep.subr.bf16.mxu0 0
          %496 = vmatpush2.bf16.msra.mxu0 0
          %497 = vmatprep.subr.bf16.mxu0 0
          %498 = vmatpush2.bf16.msra.mxu0 0
          %499 = vmatprep.mubr.bf16.mxu0 0
          %500 = vmatmul.mubr.bf16.gmra.mxu0 %v395
          %v501 = vpop.f32.mrf.mxu0
          %v502 = vadd.f32 %v417, %v501
          %v503 = vpop.f32.mrf.mxu0
          %v504 = vpop.f32.mrf.mxu0
          %v505 = vpop.f32.mrf.mxu0
          %506 = vdwg.mxu0
          %v507 = vmul.f32 %v502, %v502
          %vm508 = vcmask 1041408
          %v509 = vsel %vm508, %v507, 0.0
          %510 = vadd.xlane.f32.xlu0 %v509
          %v511 = vpop.xlane.xlu0 %510
          %v512 = vmax.f32 %v511, 1e-24
          %v513 = vrsqrt.pop %v512
          %v514 = vmul.f32 %v502, %v513
          %515 = vst [vmem:[#allocation9] sm:$0x3] %v514
        $region56: #{tpu_custom_call.1} parent=35 // pred_fallthru
          _
        // Predicated region
        $region57: #{tpu_custom_call.1} parent=35 // pred_check
          %p516 = pneg %p141
        $region58: #{tpu_custom_call.1} parent=35 // pred_check_branch
          %518 = sbr.rel (%p516) target = $region60
        $region59: #{tpu_custom_call.1} parent=35 // pred_region
          %s520 = ssub.s32 32, 32
          %521 = vsyncadd [#allocation5], %s520
          %s522 = smul.addr %s24, 32
          %s523 = scalar_lea.hbm %s4, %s522
          %s525 = sshll.u32 [#allocation9], 4
          %s526 = int_to_ptr.vmem [resolvable:$true] %s525
          %528 = dma.vmem_to_hbm [thread:$0]  %s526, 32, %s523, [#allocation5]
        $region60: #{tpu_custom_call.1} parent=35 // pred_fallthru
          _
        // Predicated region
        $region61: #{tpu_custom_call.1} parent=35 // pred_check
          %p529 = pneg %p141
        $region62: #{tpu_custom_call.1} parent=35 // pred_check_branch
          %531 = sbr.rel (%p529) target = $region64
        $region63: #{tpu_custom_call.1} parent=35 // pred_region
          %532 = dma.done [#allocation5], 32
        $region64: #{tpu_custom_call.1} parent=35 // pred_fallthru
          _
      $region36: #{tpu_custom_call.1} parent=5 // pred_fallthru
        _
      %p533 = scmp.le.s32.totalorder 2, %s15
      // Predicated region
      $region65: #{tpu_custom_call.1} parent=5 // pred_check
        %p534 = pneg %p533
      $region66: #{tpu_custom_call.1} parent=5 // pred_check_branch
        %536 = sbr.rel (%p534) target = $region68
      $region67: #{tpu_custom_call.1} parent=5 // pred_region
        %s537 = ssub.s32 %s15, 2
      $region68: #{tpu_custom_call.1} parent=5 // pred_fallthru
        _
    $region6: #{tpu_custom_call.1} parent=1 // loop_footer
      %s19 = sadd.s32 1, %s15
    $region7: #{tpu_custom_call.1} parent=1 // loop_footer_branch
      %14 = sbr.rel target = $region3
    $region8: #{tpu_custom_call.1} parent=1 // loop_exit
      _
    %538 = vsyncpa [#allocation4], 1
    %s539 = scalar_lea.sflag [#allocation4], 1
    %540 = vsyncpa %s539, 1
    %541 = vsyncpa [#allocation7], 1
    %542 = vsyncpa [#allocation5], 1
    %s543 = scalar_lea.sflag [#allocation5], 1
    %544 = vsyncpa %s543, 1

</llo_original>
